<compile_context>
chip_gen: v6e
topology: v6e:2x2x1
jax: 0.10.0
libtpu: 0.0.40
codegen_flags: <defaults>
</compile_context>

<pallas_src>
import functools

import jax
import jax.numpy as jnp
from jax import lax
from jax.experimental import pallas as pl
from jax.experimental.pallas import tpu as pltpu


def _filter_kernel(x_ref, o_ref, *, H, W):
    # x_ref: (B, C, H*W) block in its native dtype; o_ref: (B, 3, H*W) block.
    HW = H * W

    # Cast to f32 inside the kernel (no wrapper-side cast / HBM copy).
    x = x_ref[:, 0:3, :].astype(jnp.float32)
    m2x = x * -2.0

    # Neighbour-validity masks from a flat lane iota, built once per block.
    flat = lax.broadcasted_iota(jnp.int32, (1, 1, HW), 2)
    col = flat % W
    col_lo = col >= 1              # west neighbour exists (j-1)
    col_hi = col < (W - 1)         # east neighbour exists (j+1)
    row_lo = flat >= W             # north neighbour exists (i-1)
    row_hi = flat < (H - 1) * W    # south neighbour exists (i+1)

    zero = jnp.float32(0.0)

    # kernel_1 = [[0,0,0],[1,-2,1],[0,0,0]] -> x[i,j-1] + x[i,j+1] - 2x
    lf = jnp.where(col_lo, pltpu.roll(x, shift=1, axis=2), zero)
    rt = jnp.where(col_hi, pltpu.roll(x, shift=HW - 1, axis=2), zero)
    c = lf + rt + m2x
    acc = c * c

    # kernel_2 = [[0,1,0],[0,-2,0],[0,1,0]] -> x[i-1,j] + x[i+1,j] - 2x
    up = jnp.where(row_lo, pltpu.roll(x, shift=W, axis=2), zero)
    dn = jnp.where(row_hi, pltpu.roll(x, shift=HW - W, axis=2), zero)
    c = up + dn + m2x
    acc = acc + c * c

    # kernel_3 = [[0,0,1],[0,-2,0],[1,0,0]] -> x[i-1,j+1] + x[i+1,j-1] - 2x
    c = (jnp.where(col_hi, pltpu.roll(up, shift=HW - 1, axis=2), zero)
         + jnp.where(col_lo, pltpu.roll(dn, shift=1, axis=2), zero)
         + m2x)
    acc = acc + c * c

    # kernel_4 = [[1,0,0],[0,-2,0],[0,0,1]] -> x[i-1,j-1] + x[i+1,j+1] - 2x
    c = (jnp.where(col_lo, pltpu.roll(up, shift=1, axis=2), zero)
         + jnp.where(col_hi, pltpu.roll(dn, shift=HW - 1, axis=2), zero)
         + m2x)
    acc = acc + c * c

    o_ref[...] = jnp.sqrt(acc).astype(o_ref.dtype)


def _pick_block_batch(n, bytes_per_image, target_bytes, *,
                      min_steps=8, min_block_bytes=512 << 10):
    """Largest divisor of n whose block is <= target_bytes, preferring >= min_steps
    grid steps but never shrinking blocks below ~min_block_bytes."""
    cap = max(1, target_bytes // bytes_per_image)
    steps_cap = max(1, n // min_steps)
    floor_b = max(1, min_block_bytes // bytes_per_image)
    cap = min(cap, max(steps_cap, floor_b))
    cap = max(1, min(cap, n))
    for b in range(cap, 0, -1):
        if n % b == 0:
            return b
    return 1


def _tpu_vmem_capacity_bytes():
    try:
        return int(pltpu.get_tpu_info().vmem_capacity_bytes)
    except Exception:
        return 128 << 20  # conservative fallback (v5e/v6e value)


def filter_module(x, *, out_dtype=jnp.float32, target_block_bytes=None):
    """x: (N, C, H, W), C >= 3.  Returns (N, 3, H, W) in out_dtype (default f32)."""
    N, C, H, W = x.shape
    assert C >= 3, "Filter_module uses the first three input channels"
    HW = H * W

    # For very wide channel counts a one-off wrapper slice is cheaper than
    # DMA-ing the unused channels into every block.
    if C > 9:
        x = x[:, :3]
        C = 3

    # Free metadata reshape (contiguous minor dims): lane-pack the spatial plane.
    x_flat = x.reshape(N, C, HW)

    vmem_cap = _tpu_vmem_capacity_bytes()
    if target_block_bytes is None:
        # ~1 MiB on 64-MiB-VMEM parts (v7x), ~2 MiB on 128-MiB parts (v5e/v6e).
        target_block_bytes = (1 << 20) if vmem_cap <= (64 << 20) else (2 << 20)

    in_itemsize = jnp.dtype(x.dtype).itemsize
    out_itemsize = jnp.dtype(out_dtype).itemsize
    bytes_per_image = C * HW * in_itemsize
    B = _pick_block_batch(N, bytes_per_image, target_block_bytes)

    in_block_bytes = B * C * HW * in_itemsize
    out_block_bytes = B * 3 * HW * out_itemsize
    f32_block_bytes = B * 3 * HW * 4
    # 2x double-buffered in/out + ~8-10 live f32 temporaries, with headroom.
    vmem_needed = 2 * (in_block_bytes + out_block_bytes) + 10 * f32_block_bytes
    vmem_limit = min(max(32 << 20, 2 * vmem_needed), int(vmem_cap * 0.8))

    # TODO(synk): H-tiling with a 1-row halo for planes where a single image's
    #   block exceeds a few MiB (keeps v7x's 64 MiB VMEM safe and pipelined).

    kernel = functools.partial(_filter_kernel, H=H, W=W)
    out = pl.pallas_call(
        kernel,
        out_shape=jax.ShapeDtypeStruct((N, 3, HW), out_dtype),
        grid=(N // B,),
        in_specs=[pl.BlockSpec((B, C, HW), lambda i: (i, 0, 0))],
        out_specs=pl.BlockSpec((B, 3, HW), lambda i: (i, 0, 0)),
        compiler_params=pltpu.CompilerParams(
            dimension_semantics=("parallel",),
            vmem_limit_bytes=vmem_limit),
    )(x_flat)
    return out.reshape(N, 3, H, W)


def _reference(x):
    """Pure-JAX reference using lax conv (cross-correlation like F.conv2d)."""
    k1 = jnp.array([[0, 0, 0], [1, -2, 1], [0, 0, 0]], jnp.float32)
    k2 = jnp.array([[0, 1, 0], [0, -2, 0], [0, 1, 0]], jnp.float32)
    k3 = jnp.array([[0, 0, 1], [0, -2, 0], [1, 0, 0]], jnp.float32)
    k4 = jnp.array([[1, 0, 0], [0, -2, 0], [0, 0, 1]], jnp.float32)

    def conv1(plane, k):  # plane: (N,1,H,W)
        return lax.conv_general_dilated(
            plane, k[None, None], window_strides=(1, 1),
            padding=((1, 1), (1, 1)),
            dimension_numbers=("NCHW", "OIHW", "NCHW"))

    outs = []
    for c in range(3):
        p = x[:, c:c + 1].astype(jnp.float32)
        acc = sum(conv1(p, k) ** 2 for k in (k1, k2, k3, k4))
        outs.append(jnp.sqrt(acc))
    return jnp.concatenate(outs, axis=1)


if __name__ == "__main__":
    key = jax.random.PRNGKey(0)
    x = jax.random.normal(key, (2, 4, 16, 16), dtype=jnp.float32)

    filter_fn = jax.jit(filter_module)
    y = jax.block_until_ready(filter_fn(x))

    y_ref = _reference(x)
    assert y.shape == (2, 3, 16, 16)
    assert jnp.allclose(y, y_ref, atol=1e-5, rtol=1e-5), "mismatch vs reference"

    print("KERNEL_OK")
</pallas_src>

<mosaic_0001>
module attributes {stable_mosaic.version = 11 : i64} {
  func.func @_filter_kernel(%arg0: i32, %arg1: memref<2x4x256xf32, #tpu.memory_space<vmem>>, %arg2: memref<2x3x256xf32, #tpu.memory_space<vmem>>) attributes {dimension_semantics = [#tpu.dimension_semantics<parallel>], iteration_bounds = array<i64: 1>, scalar_prefetch = 0 : i64, scratch_operands = 0 : i64, tpu.core_type = #tpu.core_type<tc>, window_params = [{transform_indices = @transform_0, window_bounds = array<i64: 2, 4, 256>}, {transform_indices = @transform_1, window_bounds = array<i64: 2, 3, 256>}]} {
    %c0 = arith.constant 0 : index
    %c0_0 = arith.constant 0 : index
    %c0_1 = arith.constant 0 : index
    %0 = vector.load %arg1[%c0, %c0_0, %c0_1] : memref<2x4x256xf32, #tpu.memory_space<vmem>>, vector<2x3x256xf32>
    %cst = arith.constant -2.000000e+00 : f32
    %1 = vector.broadcast %cst : f32 to vector<2x3x256xf32>
    %2 = arith.mulf %0, %1 : vector<2x3x256xf32>
    %3 = tpu.iota {dimensions = array<i32: 2>} : vector<1x1x256xi32>
    %c16_i32 = arith.constant 16 : i32
    %c0_i32 = arith.constant 0 : i32
    %4 = arith.cmpi eq, %c16_i32, %c0_i32 : i32
    %c1_i32 = arith.constant 1 : i32
    %5 = arith.select %4, %c1_i32, %c16_i32 : i32
    %6 = vector.broadcast %5 : i32 to vector<1x1x256xi32>
    %7 = arith.remsi %3, %6 : vector<1x1x256xi32>
    %c0_i32_2 = arith.constant 0 : i32
    %8 = vector.broadcast %c0_i32_2 : i32 to vector<1x1x256xi32>
    %9 = arith.cmpi ne, %7, %8 : vector<1x1x256xi32>
    %c0_i32_3 = arith.constant 0 : i32
    %10 = vector.broadcast %c0_i32_3 : i32 to vector<1x1x256xi32>
    %11 = arith.cmpi slt, %7, %10 : vector<1x1x256xi32>
    %c0_i32_4 = arith.constant 0 : i32
    %12 = arith.cmpi slt, %5, %c0_i32_4 : i32
    %13 = vector.broadcast %12 : i1 to vector<1x1x256xi1>
    %14 = vector.broadcast %13 : vector<1x1x256xi1> to vector<1x1x256xi1>
    %15 = arith.xori %11, %14 : vector<1x1x256xi1>
    %16 = arith.andi %15, %9 : vector<1x1x256xi1>
    %17 = vector.broadcast %5 : i32 to vector<1x1x256xi32>
    %18 = arith.addi %7, %17 : vector<1x1x256xi32>
    %19 = arith.select %16, %18, %7 : vector<1x1x256xi1>, vector<1x1x256xi32>
    %c1_i32_5 = arith.constant 1 : i32
    %20 = vector.broadcast %c1_i32_5 : i32 to vector<1x1x256xi32>
    %21 = arith.cmpi sge, %19, %20 : vector<1x1x256xi32>
    %c15_i32 = arith.constant 15 : i32
    %22 = vector.broadcast %c15_i32 : i32 to vector<1x1x256xi32>
    %23 = arith.cmpi slt, %19, %22 : vector<1x1x256xi32>
    %c16_i32_6 = arith.constant 16 : i32
    %24 = vector.broadcast %c16_i32_6 : i32 to vector<1x1x256xi32>
    %25 = arith.cmpi sge, %3, %24 : vector<1x1x256xi32>
    %c240_i32 = arith.constant 240 : i32
    %26 = vector.broadcast %c240_i32 : i32 to vector<1x1x256xi32>
    %27 = arith.cmpi slt, %3, %26 : vector<1x1x256xi32>
    %c1_i32_7 = arith.constant 1 : i32
    %28 = tpu.dynamic_rotate %0 by %c1_i32_7 dim 2 : vector<2x3x256xf32>, i32 -> vector<2x3x256xf32>
    %cst_8 = arith.constant 0.000000e+00 : f32
    %29 = vector.shape_cast %21 : vector<1x1x256xi1> to vector<1x1x256xi1>
    %30 = vector.broadcast %29 : vector<1x1x256xi1> to vector<2x3x256xi1>
    %31 = vector.broadcast %cst_8 : f32 to vector<2x3x256xf32>
    %32 = arith.select %30, %28, %31 : vector<2x3x256xi1>, vector<2x3x256xf32>
    %c255_i32 = arith.constant 255 : i32
    %33 = tpu.dynamic_rotate %0 by %c255_i32 dim 2 : vector<2x3x256xf32>, i32 -> vector<2x3x256xf32>
    %cst_9 = arith.constant 0.000000e+00 : f32
    %34 = vector.shape_cast %23 : vector<1x1x256xi1> to vector<1x1x256xi1>
    %35 = vector.broadcast %34 : vector<1x1x256xi1> to vector<2x3x256xi1>
    %36 = vector.broadcast %cst_9 : f32 to vector<2x3x256xf32>
    %37 = arith.select %35, %33, %36 : vector<2x3x256xi1>, vector<2x3x256xf32>
    %38 = arith.addf %32, %37 : vector<2x3x256xf32>
    %39 = arith.addf %38, %2 : vector<2x3x256xf32>
    %40 = arith.mulf %39, %39 : vector<2x3x256xf32>
    %c16_i32_10 = arith.constant 16 : i32
    %41 = tpu.dynamic_rotate %0 by %c16_i32_10 dim 2 : vector<2x3x256xf32>, i32 -> vector<2x3x256xf32>
    %cst_11 = arith.constant 0.000000e+00 : f32
    %42 = vector.shape_cast %25 : vector<1x1x256xi1> to vector<1x1x256xi1>
    %43 = vector.broadcast %42 : vector<1x1x256xi1> to vector<2x3x256xi1>
    %44 = vector.broadcast %cst_11 : f32 to vector<2x3x256xf32>
    %45 = arith.select %43, %41, %44 : vector<2x3x256xi1>, vector<2x3x256xf32>
    %c240_i32_12 = arith.constant 240 : i32
    %46 = tpu.dynamic_rotate %0 by %c240_i32_12 dim 2 : vector<2x3x256xf32>, i32 -> vector<2x3x256xf32>
    %cst_13 = arith.constant 0.000000e+00 : f32
    %47 = vector.shape_cast %27 : vector<1x1x256xi1> to vector<1x1x256xi1>
    %48 = vector.broadcast %47 : vector<1x1x256xi1> to vector<2x3x256xi1>
    %49 = vector.broadcast %cst_13 : f32 to vector<2x3x256xf32>
    %50 = arith.select %48, %46, %49 : vector<2x3x256xi1>, vector<2x3x256xf32>
    %51 = arith.addf %45, %50 : vector<2x3x256xf32>
    %52 = arith.addf %51, %2 : vector<2x3x256xf32>
    %53 = arith.mulf %52, %52 : vector<2x3x256xf32>
    %54 = arith.addf %40, %53 : vector<2x3x256xf32>
    %c255_i32_14 = arith.constant 255 : i32
    %55 = tpu.dynamic_rotate %45 by %c255_i32_14 dim 2 : vector<2x3x256xf32>, i32 -> vector<2x3x256xf32>
    %cst_15 = arith.constant 0.000000e+00 : f32
    %56 = vector.shape_cast %23 : vector<1x1x256xi1> to vector<1x1x256xi1>
    %57 = vector.broadcast %56 : vector<1x1x256xi1> to vector<2x3x256xi1>
    %58 = vector.broadcast %cst_15 : f32 to vector<2x3x256xf32>
    %59 = arith.select %57, %55, %58 : vector<2x3x256xi1>, vector<2x3x256xf32>
    %c1_i32_16 = arith.constant 1 : i32
    %60 = tpu.dynamic_rotate %50 by %c1_i32_16 dim 2 : vector<2x3x256xf32>, i32 -> vector<2x3x256xf32>
    %cst_17 = arith.constant 0.000000e+00 : f32
    %61 = vector.shape_cast %21 : vector<1x1x256xi1> to vector<1x1x256xi1>
    %62 = vector.broadcast %61 : vector<1x1x256xi1> to vector<2x3x256xi1>
    %63 = vector.broadcast %cst_17 : f32 to vector<2x3x256xf32>
    %64 = arith.select %62, %60, %63 : vector<2x3x256xi1>, vector<2x3x256xf32>
    %65 = arith.addf %59, %64 : vector<2x3x256xf32>
    %66 = arith.addf %65, %2 : vector<2x3x256xf32>
    %67 = arith.mulf %66, %66 : vector<2x3x256xf32>
    %68 = arith.addf %54, %67 : vector<2x3x256xf32>
    %c1_i32_18 = arith.constant 1 : i32
    %69 = tpu.dynamic_rotate %45 by %c1_i32_18 dim 2 : vector<2x3x256xf32>, i32 -> vector<2x3x256xf32>
    %cst_19 = arith.constant 0.000000e+00 : f32
    %70 = vector.shape_cast %21 : vector<1x1x256xi1> to vector<1x1x256xi1>
    %71 = vector.broadcast %70 : vector<1x1x256xi1> to vector<2x3x256xi1>
    %72 = vector.broadcast %cst_19 : f32 to vector<2x3x256xf32>
    %73 = arith.select %71, %69, %72 : vector<2x3x256xi1>, vector<2x3x256xf32>
    %c255_i32_20 = arith.constant 255 : i32
    %74 = tpu.dynamic_rotate %50 by %c255_i32_20 dim 2 : vector<2x3x256xf32>, i32 -> vector<2x3x256xf32>
    %cst_21 = arith.constant 0.000000e+00 : f32
    %75 = vector.shape_cast %23 : vector<1x1x256xi1> to vector<1x1x256xi1>
    %76 = vector.broadcast %75 : vector<1x1x256xi1> to vector<2x3x256xi1>
    %77 = vector.broadcast %cst_21 : f32 to vector<2x3x256xf32>
    %78 = arith.select %76, %74, %77 : vector<2x3x256xi1>, vector<2x3x256xf32>
    %79 = arith.addf %73, %78 : vector<2x3x256xf32>
    %80 = arith.addf %79, %2 : vector<2x3x256xf32>
    %81 = arith.mulf %80, %80 : vector<2x3x256xf32>
    %82 = arith.addf %68, %81 : vector<2x3x256xf32>
    %83 = math.sqrt %82 : vector<2x3x256xf32>
    %c0_22 = arith.constant 0 : index
    %c0_23 = arith.constant 0 : index
    %c0_24 = arith.constant 0 : index
    %84 = vector.load %arg2[%c0_22, %c0_23, %c0_24] : memref<2x3x256xf32, #tpu.memory_space<vmem>>, vector<2x3x256xf32>
    tpu.vector_store %arg2[%c0_22, %c0_23, %c0_24], %83 {strides = array<i32>} : memref<2x3x256xf32, #tpu.memory_space<vmem>>, vector<2x3x256xf32>,
    return
  }
  func.func @transform_0(%arg0: i32) -> (i32, i32, i32) {
    %c0_i32 = arith.constant 0 : i32
    %c0_i32_0 = arith.constant 0 : i32
    %c0_i32_1 = arith.constant 0 : i32
    return %arg0, %c0_i32, %c0_i32_0 : i32, i32, i32
  }
  func.func @transform_1(%arg0: i32) -> (i32, i32, i32) {
    %c0_i32 = arith.constant 0 : i32
    %c0_i32_0 = arith.constant 0 : i32
    %c0_i32_1 = arith.constant 0 : i32
    return %arg0, %c0_i32, %c0_i32_0 : i32, i32, i32
  }
}

</mosaic_0001>

<llo_original>
// kernel: filter_module.1
$region0: #{filter_module.1}
  #allocation0 [shape = 'u32[]', space=smem, size = 0x4, offset = 0x4, fixed_abs, tag = 'smem constant byte address 0x4 - core index']
  #allocation1 [shape = 'u32[144,128]{1,0:T(1,128)}', space=vmem, size = 0x12000, scoped, tag = 'internal scratch']
  %s0 = inlined_call_operand.vmem [shape: f32[2,4,256], index: 0, kind: input, shape index: {}]
  %s1 = inlined_call_operand.vmem [shape: f32[2,3,256], index: 1, kind: output, shape index: {}]
  %s2 = sld [smem:[#allocation0]]
  $region14: #{filter_module.1} parent=0
    _
  %s4 = ssub.s32 1, %s2
  %s5 = scalar_select 0, %s4, %s2
  // Predicated region
  $region2: #{filter_module.1} parent=0 // pred_check
    _
  $region3: #{filter_module.1} parent=0 // pred_check_branch
    %7 = sbr.rel (0) target = $region5
  $region4: #{filter_module.1} parent=0 // pred_region
    _
  $region5: #{filter_module.1} parent=0 // pred_fallthru
    _
  %v8 = vld [vmem:[%s0] sm:$0x77]
  %v9 = vld [vmem:[%s0 + $0x8] sm:$0x77]
  %v10 = vmul.f32 %v8, -2.0
  %v11 = vmul.f32 %v9, -2.0
  %v12 = vlaneseq
  %v13 = vand.u32 %v12, 127
  %v14 = vadd.s32 %v13, 128
  %vm15 = vcmp.lt.s32.totalorder %v13, 0
  %v16 = vsub.s32 0, %v13
  %v17 = vsel %vm15, %v16, %v13
  %v18 = vshrl.u32 %v17, 4
  %v19 = vand.u32 %v17, 15
  %v20 = vsub.s32 0, %v19
  %v21 = vsel %vm15, %v20, %v19
  %vm22 = vcmp.lt.s32.totalorder %v14, 0
  %v23 = vsub.s32 0, %v14
  %v24 = vsel %vm22, %v23, %v14
  %v25 = vshrl.u32 %v24, 4
  %v26 = vand.u32 %v24, 15
  %v27 = vsub.s32 0, %v26
  %v28 = vsel %vm22, %v27, %v26
  %vm29 = vcmp.ne.s32.totalorder %v21, 0
  %vm30 = vcmp.ne.s32.totalorder %v28, 0
  %vm31 = vcmp.lt.s32.totalorder %v21, 0
  %vm32 = vcmp.lt.s32.totalorder %v28, 0
  %vm33 = vmand %vm31, %vm29
  %vm34 = vmand %vm32, %vm30
  %v35 = vadd.s32 %v21, 16
  %v36 = vadd.s32 %v28, 16
  %v37 = vsel %vm33, %v35, %v21
  %v38 = vsel %vm34, %v36, %v28
  %vm39 = vcmp.ge.s32.totalorder %v37, 1
  %vm40 = vcmp.ge.s32.totalorder %v38, 1
  %vm41 = vcmp.lt.s32.totalorder %v37, 15
  %vm42 = vcmp.lt.s32.totalorder %v38, 15
  %vm43 = vcmp.ge.s32.totalorder %v13, 16
  %vm44 = vcmp.ge.s32.totalorder %v14, 16
  %vm45 = vcmp.lt.s32.totalorder %v13, 240
  %vm46 = vcmp.lt.s32.totalorder %v14, 240
  %v49 = vcombine.high %v8, %v8
  %v50 = vcombine.high %v9, %v9
  %53 = vrot.lane.b32.xlu0 %v8, 1
  %v54 = vpop.permute.xlu0 %53
  %55 = vrot.lane.b32.xlu0 %v9, 1
  %v56 = vpop.permute.xlu0 %55
  %57 = vrot.lane.b32.xlu0 %v49, 1
  %v58 = vpop.permute.xlu0 %57
  %59 = vrot.lane.b32.xlu0 %v50, 1
  %v60 = vpop.permute.xlu0 %59
  %vm61 = vcmp.lt.s32.totalorder %v13, 1
  %v62 = vsel %vm61, %v54, %v58
  %v63 = vsel %vm61, %v56, %v60
  %v64 = vsel %vm61, %v58, %v54
  %v65 = vsel %vm61, %v60, %v56
  %v66 = vsel %vm39, 1, 0
  %v67 = vsel %vm40, 1, 0
  %vm68 = vcmp.eq.s32.totalorder %v66, 1
  %vm69 = vcmp.eq.s32.totalorder %v67, 1
  %v70 = vsel %vm68, %v64, 0.0
  %v71 = vsel %vm69, %v62, 0.0
  %v72 = vsel %vm68, %v65, 0.0
  %v73 = vsel %vm69, %v63, 0.0
  %74 = vrot.lane.b32.xlu0 %v8, 127
  %v75 = vpop.permute.xlu0 %74
  %76 = vrot.lane.b32.xlu0 %v9, 127
  %v77 = vpop.permute.xlu0 %76
  %78 = vrot.lane.b32.xlu0 %v49, 127
  %v79 = vpop.permute.xlu0 %78
  %80 = vrot.lane.b32.xlu0 %v50, 127
  %v81 = vpop.permute.xlu0 %80
  %vm82 = vcmp.lt.s32.totalorder %v13, 127
  %v83 = vsel %vm82, %v75, %v79
  %v84 = vsel %vm82, %v77, %v81
  %v85 = vsel %vm82, %v79, %v75
  %v86 = vsel %vm82, %v81, %v77
  %v87 = vsel %vm41, 1, 0
  %v88 = vsel %vm42, 1, 0
  %vm89 = vcmp.eq.s32.totalorder %v87, 1
  %vm90 = vcmp.eq.s32.totalorder %v88, 1
  %v91 = vsel %vm89, %v83, 0.0
  %v92 = vsel %vm90, %v85, 0.0
  %v93 = vsel %vm89, %v84, 0.0
  %v94 = vsel %vm90, %v86, 0.0
  %v95 = vadd.f32 %v70, %v91
  %v96 = vadd.f32 %v71, %v92
  %v97 = vadd.f32 %v72, %v93
  %v98 = vadd.f32 %v73, %v94
  %v101 = vcombine.high %v10, %v10
  %v102 = vcombine.high %v11, %v11
  %v105 = vadd.f32 %v95, %v10
  %v106 = vadd.f32 %v96, %v101
  %v107 = vadd.f32 %v97, %v11
  %v108 = vadd.f32 %v98, %v102
  %v109 = vmul.f32 %v105, %v105
  %v110 = vmul.f32 %v106, %v106
  %v111 = vmul.f32 %v107, %v107
  %v112 = vmul.f32 %v108, %v108
  %113 = vrot.lane.b32.xlu0 %v8, 16
  %v114 = vpop.permute.xlu0 %113
  %115 = vrot.lane.b32.xlu0 %v9, 16
  %v116 = vpop.permute.xlu0 %115
  %117 = vrot.lane.b32.xlu0 %v49, 16
  %v118 = vpop.permute.xlu0 %117
  %119 = vrot.lane.b32.xlu0 %v50, 16
  %v120 = vpop.permute.xlu0 %119
  %vm121 = vcmp.lt.s32.totalorder %v13, 16
  %v122 = vsel %vm121, %v114, %v118
  %v123 = vsel %vm121, %v116, %v120
  %v124 = vsel %vm121, %v118, %v114
  %v125 = vsel %vm121, %v120, %v116
  %v126 = vsel %vm43, 1, 0
  %v127 = vsel %vm44, 1, 0
  %vm128 = vcmp.eq.s32.totalorder %v126, 1
  %vm129 = vcmp.eq.s32.totalorder %v127, 1
  %v130 = vsel %vm128, %v124, 0.0
  %v131 = vsel %vm129, %v122, 0.0
  %v132 = vsel %vm128, %v125, 0.0
  %v133 = vsel %vm129, %v123, 0.0
  %134 = vrot.lane.b32.xlu0 %v8, 112
  %v135 = vpop.permute.xlu0 %134
  %136 = vrot.lane.b32.xlu0 %v9, 112
  %v137 = vpop.permute.xlu0 %136
  %138 = vrot.lane.b32.xlu0 %v49, 112
  %v139 = vpop.permute.xlu0 %138
  %140 = vrot.lane.b32.xlu0 %v50, 112
  %v141 = vpop.permute.xlu0 %140
  %vm142 = vcmp.lt.s32.totalorder %v13, 112
  %v143 = vsel %vm142, %v135, %v139
  %v144 = vsel %vm142, %v137, %v141
  %v145 = vsel %vm142, %v139, %v135
  %v146 = vsel %vm142, %v141, %v137
  %v147 = vsel %vm45, 1, 0
  %v148 = vsel %vm46, 1, 0
  %vm149 = vcmp.eq.s32.totalorder %v147, 1
  %vm150 = vcmp.eq.s32.totalorder %v148, 1
  %v151 = vsel %vm149, %v143, 0.0
  %v152 = vsel %vm150, %v145, 0.0
  %v153 = vsel %vm149, %v144, 0.0
  %v154 = vsel %vm150, %v146, 0.0
  %v155 = vadd.f32 %v130, %v151
  %v156 = vadd.f32 %v131, %v152
  %v157 = vadd.f32 %v132, %v153
  %v158 = vadd.f32 %v133, %v154
  %v159 = vadd.f32 %v155, %v10
  %v160 = vadd.f32 %v156, %v101
  %v161 = vadd.f32 %v157, %v11
  %v162 = vadd.f32 %v158, %v102
  %v163 = vmul.f32 %v159, %v159
  %v164 = vmul.f32 %v160, %v160
  %v165 = vmul.f32 %v161, %v161
  %v166 = vmul.f32 %v162, %v162
  %v167 = vadd.f32 %v109, %v163
  %v168 = vadd.f32 %v110, %v164
  %v169 = vadd.f32 %v111, %v165
  %v170 = vadd.f32 %v112, %v166
  %171 = vrot.lane.b32.xlu0 %v130, 127
  %v172 = vpop.permute.xlu0 %171
  %173 = vrot.lane.b32.xlu0 %v132, 127
  %v174 = vpop.permute.xlu0 %173
  %175 = vrot.lane.b32.xlu0 %v131, 127
  %v176 = vpop.permute.xlu0 %175
  %177 = vrot.lane.b32.xlu0 %v133, 127
  %v178 = vpop.permute.xlu0 %177
  %v179 = vsel %vm82, %v172, %v176
  %v180 = vsel %vm82, %v174, %v178
  %v181 = vsel %vm82, %v176, %v172
  %v182 = vsel %vm82, %v178, %v174
  %v183 = vsel %vm89, %v179, 0.0
  %v184 = vsel %vm90, %v181, 0.0
  %v185 = vsel %vm89, %v180, 0.0
  %v186 = vsel %vm90, %v182, 0.0
  %187 = vrot.lane.b32.xlu0 %v151, 1
  %v188 = vpop.permute.xlu0 %187
  %189 = vrot.lane.b32.xlu0 %v153, 1
  %v190 = vpop.permute.xlu0 %189
  %191 = vrot.lane.b32.xlu0 %v152, 1
  %v192 = vpop.permute.xlu0 %191
  %193 = vrot.lane.b32.xlu0 %v154, 1
  %v194 = vpop.permute.xlu0 %193
  %v195 = vsel %vm61, %v188, %v192
  %v196 = vsel %vm61, %v190, %v194
  %v197 = vsel %vm61, %v192, %v188
  %v198 = vsel %vm61, %v194, %v190
  %v199 = vsel %vm68, %v197, 0.0
  %v200 = vsel %vm69, %v195, 0.0
  %v201 = vsel %vm68, %v198, 0.0
  %v202 = vsel %vm69, %v196, 0.0
  %v203 = vadd.f32 %v183, %v199
  %v204 = vadd.f32 %v184, %v200
  %v205 = vadd.f32 %v185, %v201
  %v206 = vadd.f32 %v186, %v202
  %v207 = vadd.f32 %v203, %v10
  %v208 = vadd.f32 %v204, %v101
  %v209 = vadd.f32 %v205, %v11
  %v210 = vadd.f32 %v206, %v102
  %v211 = vmul.f32 %v207, %v207
  %v212 = vmul.f32 %v208, %v208
  %v213 = vmul.f32 %v209, %v209
  %v214 = vmul.f32 %v210, %v210
  %v215 = vadd.f32 %v167, %v211
  %v216 = vadd.f32 %v168, %v212
  %v217 = vadd.f32 %v169, %v213
  %v218 = vadd.f32 %v170, %v214
  %219 = vrot.lane.b32.xlu0 %v130, 1
  %v220 = vpop.permute.xlu0 %219
  %221 = vrot.lane.b32.xlu0 %v132, 1
  %v222 = vpop.permute.xlu0 %221
  %223 = vrot.lane.b32.xlu0 %v131, 1
  %v224 = vpop.permute.xlu0 %223
  %225 = vrot.lane.b32.xlu0 %v133, 1
  %v226 = vpop.permute.xlu0 %225
  %v227 = vsel %vm61, %v220, %v224
  %v228 = vsel %vm61, %v222, %v226
  %v229 = vsel %vm61, %v224, %v220
  %v230 = vsel %vm61, %v226, %v222
  %v231 = vsel %vm68, %v229, 0.0
  %v232 = vsel %vm69, %v227, 0.0
  %v233 = vsel %vm68, %v230, 0.0
  %v234 = vsel %vm69, %v228, 0.0
  %235 = vrot.lane.b32.xlu0 %v151, 127
  %v236 = vpop.permute.xlu0 %235
  %237 = vrot.lane.b32.xlu0 %v153, 127
  %v238 = vpop.permute.xlu0 %237
  %239 = vrot.lane.b32.xlu0 %v152, 127
  %v240 = vpop.permute.xlu0 %239
  %241 = vrot.lane.b32.xlu0 %v154, 127
  %v242 = vpop.permute.xlu0 %241
  %v243 = vsel %vm82, %v236, %v240
  %v244 = vsel %vm82, %v238, %v242
  %v245 = vsel %vm82, %v240, %v236
  %v246 = vsel %vm82, %v242, %v238
  %v247 = vsel %vm89, %v243, 0.0
  %v248 = vsel %vm90, %v245, 0.0
  %v249 = vsel %vm89, %v244, 0.0
  %v250 = vsel %vm90, %v246, 0.0
  %v251 = vadd.f32 %v231, %v247
  %v252 = vadd.f32 %v232, %v248
  %v253 = vadd.f32 %v233, %v249
  %v254 = vadd.f32 %v234, %v250
  %v255 = vadd.f32 %v251, %v10
  %v256 = vadd.f32 %v252, %v101
  %v257 = vadd.f32 %v253, %v11
  %v258 = vadd.f32 %v254, %v102
  %v259 = vmul.f32 %v255, %v255
  %v260 = vmul.f32 %v256, %v256
  %v261 = vmul.f32 %v257, %v257
  %v262 = vmul.f32 %v258, %v258
  %v263 = vadd.f32 %v215, %v259
  %v264 = vadd.f32 %v216, %v260
  %v265 = vadd.f32 %v217, %v261
  %v266 = vadd.f32 %v218, %v262
  %v267 = vrsqrt.pop %v263
  %v268 = vmul.f32 %v263, %v267
  %vm269 = vcmp.eq.f32.partialorder %v263, inf
  %v270 = vsel %vm269, %v263, %v268
  %vm271 = vcmp.eq.f32.partialorder %v263, 0.0
  %v272 = vand.u32 %v263, 2147483648
  %v273 = vsel %vm271, %v272, %v270
  %v274 = vrsqrt.pop %v264
  %v275 = vmul.f32 %v264, %v274
  %vm276 = vcmp.eq.f32.partialorder %v264, inf
  %v277 = vsel %vm276, %v264, %v275
  %vm278 = vcmp.eq.f32.partialorder %v264, 0.0
  %v279 = vand.u32 %v264, 2147483648
  %v280 = vsel %vm278, %v279, %v277
  %v281 = vrsqrt.pop %v265
  %v282 = vmul.f32 %v265, %v281
  %vm283 = vcmp.eq.f32.partialorder %v265, inf
  %v284 = vsel %vm283, %v265, %v282
  %vm285 = vcmp.eq.f32.partialorder %v265, 0.0
  %v286 = vand.u32 %v265, 2147483648
  %v287 = vsel %vm285, %v286, %v284
  %v288 = vrsqrt.pop %v266
  %v289 = vmul.f32 %v266, %v288
  %vm290 = vcmp.eq.f32.partialorder %v266, inf
  %v291 = vsel %vm290, %v266, %v289
  %vm292 = vcmp.eq.f32.partialorder %v266, 0.0
  %v293 = vand.u32 %v266, 2147483648
  %v294 = vsel %vm292, %v293, %v291
  %v299 = vcombine.low %v273, %v280
  %v300 = vcombine.low %v287, %v294
  %303 = vst [vmem:[%s1] sm:$0x77] %v299
  %304 = vst [vmem:[%s1 + $0x8] sm:$0x77] %v300
  // Predicated region
  $region6: #{filter_module.1} parent=0 // pred_check
    _
  $region7: #{filter_module.1} parent=0 // pred_check_branch
    %306 = sbr.rel (0) target = $region9
  $region8: #{filter_module.1} parent=0 // pred_region
    _
  $region9: #{filter_module.1} parent=0 // pred_fallthru
    _
  // Predicated region
  $region10: #{filter_module.1} parent=0 // pred_check
    _
  $region11: #{filter_module.1} parent=0 // pred_check_branch
    %308 = sbr.rel (0) target = $region13
  $region12: #{filter_module.1} parent=0 // pred_region
    _
  $region13: #{filter_module.1} parent=0 // pred_fallthru
    _

</llo_original>
